<compile_context>
chip_gen: v7x
topology: tpu7x:2x2x1
jax: 0.10.0
libtpu: 0.0.40
codegen_flags: <defaults>
</compile_context>

<pallas_src>
import jax
import jax.numpy as jnp
from jax.experimental import pallas as pl
from jax.experimental.pallas import tpu as pltpu

D_IN, HID, D_OUT = 1, 40, 1
K_PACK = 6                 # sample-rows packed per MXU pass (6*40 = 240 <= 256)
P = K_PACK * HID           # packed feature dim (240)
MAX_LANE = 6144            # max samples per sublane row per block (lane tile)

# Layer-2 operand dtype.  jnp.float32 keeps exact module semantics (and the
# 1e-4 check below); jnp.bfloat16 would cut MXU passes ~3x at ~1e-3 rel error.
MATMUL_DTYPE = jnp.float32


def _mlp_kernel(x_ref, w1_ref, b1_ref, w2_ref, b2_ref, w3_ref, b3_ref,
                o_ref, h1_ref):
    # x_ref / o_ref : (K_PACK, lane) samples, one scalar each.
    # w1, b1        : (HID, 1);  w2: (P, P) block-diagonal;
    # b2, w3        : (P, 1) tiled per group;  b3: (1, 1).
    # h1_ref        : (P, lane) VMEM scratch for the packed layer-1 activations.
    w1 = w1_ref[...]
    b1 = b1_ref[...]

    # ---- Layer 1: Linear(1 -> 40) + ReLU (pure VPU broadcast); the K_PACK
    #      sample-rows land at 40-sublane (8-aligned) offsets of the scratch.
    for k in range(K_PACK):                        # K_PACK=6, cheap VPU work
        xk = x_ref[k:k + 1, :]                     # (1, lane)
        h1_ref[k * HID:(k + 1) * HID, :] = jnp.maximum(w1 * xk + b1, 0.0)

    # ---- Layer 2: Linear(40 -> 40) + ReLU.  Single fused MXU stream per grid
    #      step against the (P, P) block-diagonal weight.
    h1 = h1_ref[...].astype(w2_ref.dtype)
    h2 = jnp.dot(w2_ref[...], h1, preferred_element_type=jnp.float32)
    h2 = jnp.maximum(h2 + b2_ref[...], 0.0)        # (P, lane)

    # ---- Layer 3: Linear(40 -> 1).  Multiply + per-group sublane reduce.
    prod = h2 * w3_ref[...]                        # (P, lane)
    b3 = b3_ref[...]                               # (1, 1)
    for k in range(K_PACK):
        yk = jnp.sum(prod[k * HID:(k + 1) * HID, :], axis=0, keepdims=True)
        o_ref[k:k + 1, :] = (yk + b3).astype(o_ref.dtype)


def _cdiv(a, b):
    return -(-a // b)


def regressor_forward(x, params):
    """x: [N, 1] float32.  params: dict of torch-convention weights/biases."""
    x = jnp.asarray(x, jnp.float32)
    n = x.shape[0]
    x_flat = x.reshape(-1)                         # D_IN == 1

    # --- Grid / lane sizing: make g*K_PACK*lane track N (minimal pad waste)
    #     and keep the grid even (v7x 2-TensorCore balance) when there is
    #     enough work to split.
    g = max(1, _cdiv(n, K_PACK * MAX_LANE))
    if n >= 2 * K_PACK * 128 and g % 2 == 1:
        g += 1
    lane = max(128, _cdiv(_cdiv(n, g * K_PACK), 128) * 128)
    blk = K_PACK * lane
    n_pad = g * blk
    x_packed = jnp.pad(x_flat, (0, n_pad - n)).reshape(g, K_PACK, lane)

    # --- Weights, column layout (features on sublanes), torch convention.
    f32 = jnp.float32
    w1 = jnp.asarray(params["layers.0.weight"], f32).reshape(HID, 1)
    b1 = jnp.asarray(params["layers.0.bias"], f32).reshape(HID, 1)
    w2 = jnp.asarray(params["layers.2.weight"], f32)             # (HID, HID)
    b2 = jnp.asarray(params["layers.2.bias"], f32).reshape(HID)
    w3 = jnp.asarray(params["layers.4.weight"], f32).reshape(HID)
    b3 = jnp.asarray(params["layers.4.bias"], f32).reshape(1, 1)

    # Block-diagonal layer-2 weight (exact zeros off the diagonal) and tiled
    # per-group vectors for layers 2/3.
    w2_blk = jnp.kron(jnp.eye(K_PACK, dtype=f32), w2).astype(MATMUL_DTYPE)
    b2_t = jnp.tile(b2, K_PACK).reshape(P, 1)
    w3_t = jnp.tile(w3, K_PACK).reshape(P, 1)

    const = lambda shape: pl.BlockSpec(shape, lambda i, _s=shape: (0,) * len(_s))

    out = pl.pallas_call(
        _mlp_kernel,
        out_shape=jax.ShapeDtypeStruct((g, K_PACK, lane), jnp.float32),
        grid_spec=pltpu.PrefetchScalarGridSpec(
            num_scalar_prefetch=0,
            grid=(g,),
            in_specs=[
                pl.BlockSpec((None, K_PACK, lane), lambda i: (i, 0, 0)),  # x
                const((HID, 1)),      # w1
                const((HID, 1)),      # b1
                const((P, P)),        # w2 (block-diagonal)
                const((P, 1)),        # b2 (tiled)
                const((P, 1)),        # w3 (tiled)
                const((1, 1)),        # b3
            ],
            out_specs=pl.BlockSpec((None, K_PACK, lane), lambda i: (i, 0, 0)),
            scratch_shapes=[pltpu.VMEM((P, lane), jnp.float32)],
        ),
        compiler_params=pltpu.CompilerParams(
            dimension_semantics=("parallel",),
            vmem_limit_bytes=48 * 1024 * 1024,
        ),
    )(x_packed, w1, b1, w2_blk, b2_t, w3_t, b3)

    return out.reshape(-1)[:n].reshape(n, D_OUT)


def init_params(key):
    """Deterministic init matching nn.Linear shapes (torch convention)."""
    ks = jax.random.split(key, 6)

    def uniform(k, shape, fan_in):
        bound = 1.0 / jnp.sqrt(jnp.float32(fan_in))
        return jax.random.uniform(k, shape, jnp.float32, -bound, bound)

    return {
        "layers.0.weight": uniform(ks[0], (HID, D_IN), D_IN),
        "layers.0.bias":   uniform(ks[1], (HID,), D_IN),
        "layers.2.weight": uniform(ks[2], (HID, HID), HID),
        "layers.2.bias":   uniform(ks[3], (HID,), HID),
        "layers.4.weight": uniform(ks[4], (D_OUT, HID), HID),
        "layers.4.bias":   uniform(ks[5], (D_OUT,), HID),
    }


def regressor_reference(x, p):
    hi = jax.lax.Precision.HIGHEST
    h = jnp.maximum(jnp.dot(x, p["layers.0.weight"].T, precision=hi)
                    + p["layers.0.bias"], 0.0)
    h = jnp.maximum(jnp.dot(h, p["layers.2.weight"].T, precision=hi)
                    + p["layers.2.bias"], 0.0)
    return jnp.dot(h, p["layers.4.weight"].T, precision=hi) + p["layers.4.bias"]


if __name__ == "__main__":
    key = jax.random.PRNGKey(0)
    k_params, k_x1, k_x2 = jax.random.split(key, 3)
    params = init_params(k_params)

    # Small example batch consistent with the module: x is [N, 1].
    x = jax.random.normal(k_x1, (8, 1), jnp.float32)
    y = jax.block_until_ready(regressor_forward(x, params))
    y_ref = regressor_reference(x, params)
    assert y.shape == (8, 1), y.shape
    assert jnp.allclose(y, y_ref, atol=1e-4, rtol=1e-4), (y, y_ref)

    # Larger, non-tile-aligned batch: exercises the multi-step (even) grid,
    # N-tracking lane sizing and tail padding.
    x_big = jax.random.normal(k_x2, (40000, 1), jnp.float32)
    y_big = jax.block_until_ready(regressor_forward(x_big, params))
    y_big_ref = regressor_reference(x_big, params)
    assert y_big.shape == (40000, 1), y_big.shape
    assert jnp.allclose(y_big, y_big_ref, atol=1e-4, rtol=1e-4)

    print("KERNEL_OK")
</pallas_src>

<mosaic_0001>
module attributes {stable_mosaic.version = 11 : i64} {
  func.func @_mlp_kernel(%arg0: i32, %arg1: memref<1x6x128xf32, #tpu.memory_space<vmem>>, %arg2: memref<40x1xf32, #tpu.memory_space<vmem>>, %arg3: memref<40x1xf32, #tpu.memory_space<vmem>>, %arg4: memref<240x240xf32, #tpu.memory_space<vmem>>, %arg5: memref<240x1xf32, #tpu.memory_space<vmem>>, %arg6: memref<240x1xf32, #tpu.memory_space<vmem>>, %arg7: memref<1x1xf32, #tpu.memory_space<vmem>>, %arg8: memref<1x6x128xf32, #tpu.memory_space<vmem>>, %arg9: memref<240x128xf32, #tpu.memory_space<vmem>>) attributes {dimension_semantics = [#tpu.dimension_semantics<parallel>], iteration_bounds = array<i64: 1>, scalar_prefetch = 0 : i64, scratch_operands = 1 : i64, tpu.core_type = #tpu.core_type<tc>, window_params = [{transform_indices = @transform_0, window_bounds = array<i64: 1, 6, 128>}, {pipeline_mode = #tpu.pipeline_mode<synchronous>, transform_indices = @transform_1, window_bounds = array<i64: 40, 1>}, {pipeline_mode = #tpu.pipeline_mode<synchronous>, transform_indices = @transform_2, window_bounds = array<i64: 40, 1>}, {pipeline_mode = #tpu.pipeline_mode<synchronous>, transform_indices = @transform_3, window_bounds = array<i64: 240, 240>}, {pipeline_mode = #tpu.pipeline_mode<synchronous>, transform_indices = @transform_4, window_bounds = array<i64: 240, 1>}, {pipeline_mode = #tpu.pipeline_mode<synchronous>, transform_indices = @transform_5, window_bounds = array<i64: 240, 1>}, {pipeline_mode = #tpu.pipeline_mode<synchronous>, transform_indices = @transform_6, window_bounds = array<i64: 1, 1>}, {transform_indices = @transform_7, window_bounds = array<i64: 1, 6, 128>}]} {
    %c0 = arith.constant 0 : index
    %c0_0 = arith.constant 0 : index
    %0 = vector.load %arg2[%c0, %c0_0] : memref<40x1xf32, #tpu.memory_space<vmem>>, vector<40x1xf32>
    %c0_1 = arith.constant 0 : index
    %c0_2 = arith.constant 0 : index
    %1 = vector.load %arg3[%c0_1, %c0_2] : memref<40x1xf32, #tpu.memory_space<vmem>>, vector<40x1xf32>
    %c0_3 = arith.constant 0 : index
    %c0_4 = arith.constant 0 : index
    %c0_5 = arith.constant 0 : index
    %2 = vector.load %arg1[%c0_3, %c0_4, %c0_5] : memref<1x6x128xf32, #tpu.memory_space<vmem>>, vector<1x1x128xf32>
    %3 = vector.shape_cast %2 : vector<1x1x128xf32> to vector<1x128xf32>
    %4 = vector.broadcast %0 : vector<40x1xf32> to vector<40x128xf32>
    %5 = vector.broadcast %3 : vector<1x128xf32> to vector<40x128xf32>
    %6 = arith.mulf %4, %5 : vector<40x128xf32>
    %7 = vector.broadcast %1 : vector<40x1xf32> to vector<40x128xf32>
    %8 = arith.addf %6, %7 : vector<40x128xf32>
    %cst = arith.constant 0.000000e+00 : f32
    %9 = vector.broadcast %cst : f32 to vector<40x128xf32>
    %10 = arith.maximumf %8, %9 : vector<40x128xf32>
    %c0_6 = arith.constant 0 : index
    %c0_7 = arith.constant 0 : index
    %11 = vector.load %arg9[%c0_6, %c0_7] : memref<240x128xf32, #tpu.memory_space<vmem>>, vector<40x128xf32>
    tpu.vector_store %arg9[%c0_6, %c0_7], %10 {strides = array<i32>} : memref<240x128xf32, #tpu.memory_space<vmem>>, vector<40x128xf32>,
    %c0_8 = arith.constant 0 : index
    %c1 = arith.constant 1 : index
    %c0_9 = arith.constant 0 : index
    %12 = vector.load %arg1[%c0_8, %c1, %c0_9] : memref<1x6x128xf32, #tpu.memory_space<vmem>>, vector<1x1x128xf32>
    %13 = vector.shape_cast %12 : vector<1x1x128xf32> to vector<1x128xf32>
    %14 = vector.broadcast %0 : vector<40x1xf32> to vector<40x128xf32>
    %15 = vector.broadcast %13 : vector<1x128xf32> to vector<40x128xf32>
    %16 = arith.mulf %14, %15 : vector<40x128xf32>
    %17 = vector.broadcast %1 : vector<40x1xf32> to vector<40x128xf32>
    %18 = arith.addf %16, %17 : vector<40x128xf32>
    %cst_10 = arith.constant 0.000000e+00 : f32
    %19 = vector.broadcast %cst_10 : f32 to vector<40x128xf32>
    %20 = arith.maximumf %18, %19 : vector<40x128xf32>
    %c40 = arith.constant 40 : index
    %c0_11 = arith.constant 0 : index
    %21 = vector.load %arg9[%c40, %c0_11] : memref<240x128xf32, #tpu.memory_space<vmem>>, vector<40x128xf32>
    tpu.vector_store %arg9[%c40, %c0_11], %20 {strides = array<i32>} : memref<240x128xf32, #tpu.memory_space<vmem>>, vector<40x128xf32>,
    %c0_12 = arith.constant 0 : index
    %c2 = arith.constant 2 : index
    %c0_13 = arith.constant 0 : index
    %22 = vector.load %arg1[%c0_12, %c2, %c0_13] : memref<1x6x128xf32, #tpu.memory_space<vmem>>, vector<1x1x128xf32>
    %23 = vector.shape_cast %22 : vector<1x1x128xf32> to vector<1x128xf32>
    %24 = vector.broadcast %0 : vector<40x1xf32> to vector<40x128xf32>
    %25 = vector.broadcast %23 : vector<1x128xf32> to vector<40x128xf32>
    %26 = arith.mulf %24, %25 : vector<40x128xf32>
    %27 = vector.broadcast %1 : vector<40x1xf32> to vector<40x128xf32>
    %28 = arith.addf %26, %27 : vector<40x128xf32>
    %cst_14 = arith.constant 0.000000e+00 : f32
    %29 = vector.broadcast %cst_14 : f32 to vector<40x128xf32>
    %30 = arith.maximumf %28, %29 : vector<40x128xf32>
    %c80 = arith.constant 80 : index
    %c0_15 = arith.constant 0 : index
    %31 = vector.load %arg9[%c80, %c0_15] : memref<240x128xf32, #tpu.memory_space<vmem>>, vector<40x128xf32>
    tpu.vector_store %arg9[%c80, %c0_15], %30 {strides = array<i32>} : memref<240x128xf32, #tpu.memory_space<vmem>>, vector<40x128xf32>,
    %c0_16 = arith.constant 0 : index
    %c3 = arith.constant 3 : index
    %c0_17 = arith.constant 0 : index
    %32 = vector.load %arg1[%c0_16, %c3, %c0_17] : memref<1x6x128xf32, #tpu.memory_space<vmem>>, vector<1x1x128xf32>
    %33 = vector.shape_cast %32 : vector<1x1x128xf32> to vector<1x128xf32>
    %34 = vector.broadcast %0 : vector<40x1xf32> to vector<40x128xf32>
    %35 = vector.broadcast %33 : vector<1x128xf32> to vector<40x128xf32>
    %36 = arith.mulf %34, %35 : vector<40x128xf32>
    %37 = vector.broadcast %1 : vector<40x1xf32> to vector<40x128xf32>
    %38 = arith.addf %36, %37 : vector<40x128xf32>
    %cst_18 = arith.constant 0.000000e+00 : f32
    %39 = vector.broadcast %cst_18 : f32 to vector<40x128xf32>
    %40 = arith.maximumf %38, %39 : vector<40x128xf32>
    %c120 = arith.constant 120 : index
    %c0_19 = arith.constant 0 : index
    %41 = vector.load %arg9[%c120, %c0_19] : memref<240x128xf32, #tpu.memory_space<vmem>>, vector<40x128xf32>
    tpu.vector_store %arg9[%c120, %c0_19], %40 {strides = array<i32>} : memref<240x128xf32, #tpu.memory_space<vmem>>, vector<40x128xf32>,
    %c0_20 = arith.constant 0 : index
    %c4 = arith.constant 4 : index
    %c0_21 = arith.constant 0 : index
    %42 = vector.load %arg1[%c0_20, %c4, %c0_21] : memref<1x6x128xf32, #tpu.memory_space<vmem>>, vector<1x1x128xf32>
    %43 = vector.shape_cast %42 : vector<1x1x128xf32> to vector<1x128xf32>
    %44 = vector.broadcast %0 : vector<40x1xf32> to vector<40x128xf32>
    %45 = vector.broadcast %43 : vector<1x128xf32> to vector<40x128xf32>
    %46 = arith.mulf %44, %45 : vector<40x128xf32>
    %47 = vector.broadcast %1 : vector<40x1xf32> to vector<40x128xf32>
    %48 = arith.addf %46, %47 : vector<40x128xf32>
    %cst_22 = arith.constant 0.000000e+00 : f32
    %49 = vector.broadcast %cst_22 : f32 to vector<40x128xf32>
    %50 = arith.maximumf %48, %49 : vector<40x128xf32>
    %c160 = arith.constant 160 : index
    %c0_23 = arith.constant 0 : index
    %51 = vector.load %arg9[%c160, %c0_23] : memref<240x128xf32, #tpu.memory_space<vmem>>, vector<40x128xf32>
    tpu.vector_store %arg9[%c160, %c0_23], %50 {strides = array<i32>} : memref<240x128xf32, #tpu.memory_space<vmem>>, vector<40x128xf32>,
    %c0_24 = arith.constant 0 : index
    %c5 = arith.constant 5 : index
    %c0_25 = arith.constant 0 : index
    %52 = vector.load %arg1[%c0_24, %c5, %c0_25] : memref<1x6x128xf32, #tpu.memory_space<vmem>>, vector<1x1x128xf32>
    %53 = vector.shape_cast %52 : vector<1x1x128xf32> to vector<1x128xf32>
    %54 = vector.broadcast %0 : vector<40x1xf32> to vector<40x128xf32>
    %55 = vector.broadcast %53 : vector<1x128xf32> to vector<40x128xf32>
    %56 = arith.mulf %54, %55 : vector<40x128xf32>
    %57 = vector.broadcast %1 : vector<40x1xf32> to vector<40x128xf32>
    %58 = arith.addf %56, %57 : vector<40x128xf32>
    %cst_26 = arith.constant 0.000000e+00 : f32
    %59 = vector.broadcast %cst_26 : f32 to vector<40x128xf32>
    %60 = arith.maximumf %58, %59 : vector<40x128xf32>
    %c200 = arith.constant 200 : index
    %c0_27 = arith.constant 0 : index
    %61 = vector.load %arg9[%c200, %c0_27] : memref<240x128xf32, #tpu.memory_space<vmem>>, vector<40x128xf32>
    tpu.vector_store %arg9[%c200, %c0_27], %60 {strides = array<i32>} : memref<240x128xf32, #tpu.memory_space<vmem>>, vector<40x128xf32>,
    %c0_28 = arith.constant 0 : index
    %c0_29 = arith.constant 0 : index
    %62 = vector.load %arg9[%c0_28, %c0_29] : memref<240x128xf32, #tpu.memory_space<vmem>>, vector<240x128xf32>
    %c0_30 = arith.constant 0 : index
    %c0_31 = arith.constant 0 : index
    %63 = vector.load %arg4[%c0_30, %c0_31] : memref<240x240xf32, #tpu.memory_space<vmem>>, vector<240x240xf32>
    %cst_32 = arith.constant dense<0.000000e+00> : vector<240x128xf32>
    %64 = tpu.matmul %63, %62, %cst_32 {dimension_numbers = #tpu.dot_dimension_numbers<[1], [0], [0], [1], [0, 0, 1, 1], [], []>} : vector<240x240xf32>, vector<240x128xf32>, vector<240x128xf32> -> vector<240x128xf32>
    %c0_33 = arith.constant 0 : index
    %c0_34 = arith.constant 0 : index
    %65 = vector.load %arg5[%c0_33, %c0_34] : memref<240x1xf32, #tpu.memory_space<vmem>>, vector<240x1xf32>
    %66 = vector.broadcast %65 : vector<240x1xf32> to vector<240x128xf32>
    %67 = arith.addf %64, %66 : vector<240x128xf32>
    %cst_35 = arith.constant 0.000000e+00 : f32
    %68 = vector.broadcast %cst_35 : f32 to vector<240x128xf32>
    %69 = arith.maximumf %67, %68 : vector<240x128xf32>
    %c0_36 = arith.constant 0 : index
    %c0_37 = arith.constant 0 : index
    %70 = vector.load %arg6[%c0_36, %c0_37] : memref<240x1xf32, #tpu.memory_space<vmem>>, vector<240x1xf32>
    %71 = vector.broadcast %70 : vector<240x1xf32> to vector<240x128xf32>
    %72 = arith.mulf %69, %71 : vector<240x128xf32>
    %c0_38 = arith.constant 0 : index
    %c0_39 = arith.constant 0 : index
    %73 = vector.load %arg7[%c0_38, %c0_39] : memref<1x1xf32, #tpu.memory_space<vmem>>, vector<1x1xf32>
    %74 = vector.extract_strided_slice %72 {offsets = [0, 0], sizes = [40, 128], strides = [1, 1]} : vector<240x128xf32> to vector<40x128xf32>
    %cst_40 = arith.constant dense<0.000000e+00> : vector<128xf32>
    %75 = vector.multi_reduction <add>, %74, %cst_40 [0] : vector<40x128xf32> to vector<128xf32>
    %76 = vector.shape_cast %75 : vector<128xf32> to vector<1x128xf32>
    %77 = vector.broadcast %73 : vector<1x1xf32> to vector<1x128xf32>
    %78 = arith.addf %76, %77 : vector<1x128xf32>
    %c0_41 = arith.constant 0 : index
    %c0_42 = arith.constant 0 : index
    %c0_43 = arith.constant 0 : index
    %79 = vector.load %arg8[%c0_41, %c0_42, %c0_43] : memref<1x6x128xf32, #tpu.memory_space<vmem>>, vector<1x1x128xf32>
    %80 = vector.shape_cast %79 : vector<1x1x128xf32> to vector<1x128xf32>
    %81 = vector.shape_cast %78 : vector<1x128xf32> to vector<1x1x128xf32>
    tpu.vector_store %arg8[%c0_41, %c0_42, %c0_43], %81 {strides = array<i32>} : memref<1x6x128xf32, #tpu.memory_space<vmem>>, vector<1x1x128xf32>,
    %82 = vector.extract_strided_slice %72 {offsets = [40, 0], sizes = [40, 128], strides = [1, 1]} : vector<240x128xf32> to vector<40x128xf32>
    %cst_44 = arith.constant dense<0.000000e+00> : vector<128xf32>
    %83 = vector.multi_reduction <add>, %82, %cst_44 [0] : vector<40x128xf32> to vector<128xf32>
    %84 = vector.shape_cast %83 : vector<128xf32> to vector<1x128xf32>
    %85 = vector.broadcast %73 : vector<1x1xf32> to vector<1x128xf32>
    %86 = arith.addf %84, %85 : vector<1x128xf32>
    %c0_45 = arith.constant 0 : index
    %c1_46 = arith.constant 1 : index
    %c0_47 = arith.constant 0 : index
    %87 = vector.load %arg8[%c0_45, %c1_46, %c0_47] : memref<1x6x128xf32, #tpu.memory_space<vmem>>, vector<1x1x128xf32>
    %88 = vector.shape_cast %87 : vector<1x1x128xf32> to vector<1x128xf32>
    %89 = vector.shape_cast %86 : vector<1x128xf32> to vector<1x1x128xf32>
    tpu.vector_store %arg8[%c0_45, %c1_46, %c0_47], %89 {strides = array<i32>} : memref<1x6x128xf32, #tpu.memory_space<vmem>>, vector<1x1x128xf32>,
    %90 = vector.extract_strided_slice %72 {offsets = [80, 0], sizes = [40, 128], strides = [1, 1]} : vector<240x128xf32> to vector<40x128xf32>
    %cst_48 = arith.constant dense<0.000000e+00> : vector<128xf32>
    %91 = vector.multi_reduction <add>, %90, %cst_48 [0] : vector<40x128xf32> to vector<128xf32>
    %92 = vector.shape_cast %91 : vector<128xf32> to vector<1x128xf32>
    %93 = vector.broadcast %73 : vector<1x1xf32> to vector<1x128xf32>
    %94 = arith.addf %92, %93 : vector<1x128xf32>
    %c0_49 = arith.constant 0 : index
    %c2_50 = arith.constant 2 : index
    %c0_51 = arith.constant 0 : index
    %95 = vector.load %arg8[%c0_49, %c2_50, %c0_51] : memref<1x6x128xf32, #tpu.memory_space<vmem>>, vector<1x1x128xf32>
    %96 = vector.shape_cast %95 : vector<1x1x128xf32> to vector<1x128xf32>
    %97 = vector.shape_cast %94 : vector<1x128xf32> to vector<1x1x128xf32>
    tpu.vector_store %arg8[%c0_49, %c2_50, %c0_51], %97 {strides = array<i32>} : memref<1x6x128xf32, #tpu.memory_space<vmem>>, vector<1x1x128xf32>,
    %98 = vector.extract_strided_slice %72 {offsets = [120, 0], sizes = [40, 128], strides = [1, 1]} : vector<240x128xf32> to vector<40x128xf32>
    %cst_52 = arith.constant dense<0.000000e+00> : vector<128xf32>
    %99 = vector.multi_reduction <add>, %98, %cst_52 [0] : vector<40x128xf32> to vector<128xf32>
    %100 = vector.shape_cast %99 : vector<128xf32> to vector<1x128xf32>
    %101 = vector.broadcast %73 : vector<1x1xf32> to vector<1x128xf32>
    %102 = arith.addf %100, %101 : vector<1x128xf32>
    %c0_53 = arith.constant 0 : index
    %c3_54 = arith.constant 3 : index
    %c0_55 = arith.constant 0 : index
    %103 = vector.load %arg8[%c0_53, %c3_54, %c0_55] : memref<1x6x128xf32, #tpu.memory_space<vmem>>, vector<1x1x128xf32>
    %104 = vector.shape_cast %103 : vector<1x1x128xf32> to vector<1x128xf32>
    %105 = vector.shape_cast %102 : vector<1x128xf32> to vector<1x1x128xf32>
    tpu.vector_store %arg8[%c0_53, %c3_54, %c0_55], %105 {strides = array<i32>} : memref<1x6x128xf32, #tpu.memory_space<vmem>>, vector<1x1x128xf32>,
    %106 = vector.extract_strided_slice %72 {offsets = [160, 0], sizes = [40, 128], strides = [1, 1]} : vector<240x128xf32> to vector<40x128xf32>
    %cst_56 = arith.constant dense<0.000000e+00> : vector<128xf32>
    %107 = vector.multi_reduction <add>, %106, %cst_56 [0] : vector<40x128xf32> to vector<128xf32>
    %108 = vector.shape_cast %107 : vector<128xf32> to vector<1x128xf32>
    %109 = vector.broadcast %73 : vector<1x1xf32> to vector<1x128xf32>
    %110 = arith.addf %108, %109 : vector<1x128xf32>
    %c0_57 = arith.constant 0 : index
    %c4_58 = arith.constant 4 : index
    %c0_59 = arith.constant 0 : index
    %111 = vector.load %arg8[%c0_57, %c4_58, %c0_59] : memref<1x6x128xf32, #tpu.memory_space<vmem>>, vector<1x1x128xf32>
    %112 = vector.shape_cast %111 : vector<1x1x128xf32> to vector<1x128xf32>
    %113 = vector.shape_cast %110 : vector<1x128xf32> to vector<1x1x128xf32>
    tpu.vector_store %arg8[%c0_57, %c4_58, %c0_59], %113 {strides = array<i32>} : memref<1x6x128xf32, #tpu.memory_space<vmem>>, vector<1x1x128xf32>,
    %114 = vector.extract_strided_slice %72 {offsets = [200, 0], sizes = [40, 128], strides = [1, 1]} : vector<240x128xf32> to vector<40x128xf32>
    %cst_60 = arith.constant dense<0.000000e+00> : vector<128xf32>
    %115 = vector.multi_reduction <add>, %114, %cst_60 [0] : vector<40x128xf32> to vector<128xf32>
    %116 = vector.shape_cast %115 : vector<128xf32> to vector<1x128xf32>
    %117 = vector.broadcast %73 : vector<1x1xf32> to vector<1x128xf32>
    %118 = arith.addf %116, %117 : vector<1x128xf32>
    %c0_61 = arith.constant 0 : index
    %c5_62 = arith.constant 5 : index
    %c0_63 = arith.constant 0 : index
    %119 = vector.load %arg8[%c0_61, %c5_62, %c0_63] : memref<1x6x128xf32, #tpu.memory_space<vmem>>, vector<1x1x128xf32>
    %120 = vector.shape_cast %119 : vector<1x1x128xf32> to vector<1x128xf32>
    %121 = vector.shape_cast %118 : vector<1x128xf32> to vector<1x1x128xf32>
    tpu.vector_store %arg8[%c0_61, %c5_62, %c0_63], %121 {strides = array<i32>} : memref<1x6x128xf32, #tpu.memory_space<vmem>>, vector<1x1x128xf32>,
    return
  }
  func.func @transform_0(%arg0: i32) -> (i32, i32, i32) {
    %c0_i32 = arith.constant 0 : i32
    %c0_i32_0 = arith.constant 0 : i32
    %c0_i32_1 = arith.constant 0 : i32
    return %arg0, %c0_i32, %c0_i32_0 : i32, i32, i32
  }
  func.func @transform_1(%arg0: i32) -> (i32, i32) {
    %c0_i32 = arith.constant 0 : i32
    %c0_i32_0 = arith.constant 0 : i32
    %c0_i32_1 = arith.constant 0 : i32
    return %c0_i32, %c0_i32_0 : i32, i32
  }
  func.func @transform_2(%arg0: i32) -> (i32, i32) {
    %c0_i32 = arith.constant 0 : i32
    %c0_i32_0 = arith.constant 0 : i32
    %c0_i32_1 = arith.constant 0 : i32
    return %c0_i32, %c0_i32_0 : i32, i32
  }
  func.func @transform_3(%arg0: i32) -> (i32, i32) {
    %c0_i32 = arith.constant 0 : i32
    %c0_i32_0 = arith.constant 0 : i32
    %c0_i32_1 = arith.constant 0 : i32
    return %c0_i32, %c0_i32_0 : i32, i32
  }
  func.func @transform_4(%arg0: i32) -> (i32, i32) {
    %c0_i32 = arith.constant 0 : i32
    %c0_i32_0 = arith.constant 0 : i32
    %c0_i32_1 = arith.constant 0 : i32
    return %c0_i32, %c0_i32_0 : i32, i32
  }
  func.func @transform_5(%arg0: i32) -> (i32, i32) {
    %c0_i32 = arith.constant 0 : i32
    %c0_i32_0 = arith.constant 0 : i32
    %c0_i32_1 = arith.constant 0 : i32
    return %c0_i32, %c0_i32_0 : i32, i32
  }
  func.func @transform_6(%arg0: i32) -> (i32, i32) {
    %c0_i32 = arith.constant 0 : i32
    %c0_i32_0 = arith.constant 0 : i32
    %c0_i32_1 = arith.constant 0 : i32
    return %c0_i32, %c0_i32_0 : i32, i32
  }
  func.func @transform_7(%arg0: i32) -> (i32, i32, i32) {
    %c0_i32 = arith.constant 0 : i32
    %c0_i32_0 = arith.constant 0 : i32
    %c0_i32_1 = arith.constant 0 : i32
    return %arg0, %c0_i32, %c0_i32_0 : i32, i32, i32
  }
}

</mosaic_0001>

<llo_original>
// kernel: tpu_custom_call.1
$region0: #{tpu_custom_call.1}
  #allocation0 [shape = 'u32[]', space=smem, size = 0x4, offset = 0x4, fixed_abs, tag = 'smem constant byte address 0x4 - core index']
  #allocation1 [shape = 'u32[144,128]{1,0:T(1,128)}', space=vmem, size = 0x12000, scoped, tag = 'internal scratch']
  #allocation2 [shape = 'f32[240,128]{1,0:T(8,128)}', space=vmem, size = 0x1e000, scoped, tag = 'scratch operand']
  #allocation3 [shape = 'f32[1,1]{1,0:T(1,128)S(1)}', space=vmem, size = 0x200, scoped, tag = 'scoped memory for tpu_custom_call.1']
  %s0 = inlined_call_operand.vmem [shape: f32[1,6,128], index: 0, kind: input, shape index: {}]
  %s1 = inlined_call_operand.vmem [shape: f32[40,1], index: 1, kind: input, shape index: {}]
  %s2 = inlined_call_operand.vmem [shape: f32[40,1], index: 2, kind: input, shape index: {}]
  %s3 = inlined_call_operand.vmem [shape: f32[240,240], index: 3, kind: input, shape index: {}]
  %s4 = inlined_call_operand.vmem [shape: f32[240,1], index: 4, kind: input, shape index: {}]
  %s5 = inlined_call_operand.vmem [shape: f32[240,1], index: 5, kind: input, shape index: {}]
  %s6 = inlined_call_operand.<no memory space> [shape: f32[1,1], index: 6, kind: input, shape index: {}]
  %s7 = inlined_call_operand.vmem [shape: f32[1,6,128], index: 7, kind: output, shape index: {}]
  %s8 = sld [smem:[#allocation0]]
  $region38: #{tpu_custom_call.1} parent=0
    _
  %s10 = ssub.s32 1, %s8
  %s11 = scalar_select 0, %s10, %s8
  %v12 = vstv %s6
  %13 = vst [vmem:[#allocation3] sm:$0x1] %v12
  // Predicated region
  $region2: #{tpu_custom_call.1} parent=0 // pred_check
    _
  $region3: #{tpu_custom_call.1} parent=0 // pred_check_branch
    %15 = sbr.rel (0) target = $region5
  $region4: #{tpu_custom_call.1} parent=0 // pred_region
    _
  $region5: #{tpu_custom_call.1} parent=0 // pred_fallthru
    _
  // Predicated region
  $region6: #{tpu_custom_call.1} parent=0 // pred_check
    _
  $region7: #{tpu_custom_call.1} parent=0 // pred_check_branch
    %17 = sbr.rel (0) target = $region9
  $region8: #{tpu_custom_call.1} parent=0 // pred_region
    _
  $region9: #{tpu_custom_call.1} parent=0 // pred_fallthru
    _
  // Predicated region
  $region10: #{tpu_custom_call.1} parent=0 // pred_check
    _
  $region11: #{tpu_custom_call.1} parent=0 // pred_check_branch
    %19 = sbr.rel (0) target = $region13
  $region12: #{tpu_custom_call.1} parent=0 // pred_region
    _
  $region13: #{tpu_custom_call.1} parent=0 // pred_fallthru
    _
  // Predicated region
  $region14: #{tpu_custom_call.1} parent=0 // pred_check
    _
  $region15: #{tpu_custom_call.1} parent=0 // pred_check_branch
    %21 = sbr.rel (0) target = $region17
  $region16: #{tpu_custom_call.1} parent=0 // pred_region
    _
  $region17: #{tpu_custom_call.1} parent=0 // pred_fallthru
    _
  // Predicated region
  $region18: #{tpu_custom_call.1} parent=0 // pred_check
    _
  $region19: #{tpu_custom_call.1} parent=0 // pred_check_branch
    %23 = sbr.rel (0) target = $region21
  $region20: #{tpu_custom_call.1} parent=0 // pred_region
    _
  $region21: #{tpu_custom_call.1} parent=0 // pred_fallthru
    _
  // Predicated region
  $region22: #{tpu_custom_call.1} parent=0 // pred_check
    _
  $region23: #{tpu_custom_call.1} parent=0 // pred_check_branch
    %25 = sbr.rel (0) target = $region25
  $region24: #{tpu_custom_call.1} parent=0 // pred_region
    _
  $region25: #{tpu_custom_call.1} parent=0 // pred_fallthru
    _
  // Predicated region
  $region26: #{tpu_custom_call.1} parent=0 // pred_check
    _
  $region27: #{tpu_custom_call.1} parent=0 // pred_check_branch
    %27 = sbr.rel (0) target = $region29
  $region28: #{tpu_custom_call.1} parent=0 // pred_region
    _
  $region29: #{tpu_custom_call.1} parent=0 // pred_fallthru
    _
  %v28 = vld [vmem:[%s1] sm:$0xff]
  %v29 = vld [vmem:[%s1 + $0x8] sm:$0xff]
  %v30 = vld [vmem:[%s1 + $0x10] sm:$0xff]
  %v31 = vld [vmem:[%s1 + $0x18] sm:$0xff]
  %v32 = vld [vmem:[%s1 + $0x20] sm:$0xff]
  %v33 = vld [vmem:[%s2] sm:$0xff]
  %v34 = vld [vmem:[%s2 + $0x8] sm:$0xff]
  %v35 = vld [vmem:[%s2 + $0x10] sm:$0xff]
  %v36 = vld [vmem:[%s2 + $0x18] sm:$0xff]
  %v37 = vld [vmem:[%s2 + $0x20] sm:$0xff]
  %v38 = vld [vmem:[%s0] sm:$0x1]
  %40 = vset.pattern.permute.xlu0 0
  %41 = vperm.xlu0 %40, %v28
  %v42 = vpop.permute.xlu0 %41
  %45 = vset.pattern.permute.xlu0 0
  %46 = vperm.xlu0 %45, %v29
  %v47 = vpop.permute.xlu0 %46
  %50 = vset.pattern.permute.xlu0 0
  %51 = vperm.xlu0 %50, %v30
  %v52 = vpop.permute.xlu0 %51
  %55 = vset.pattern.permute.xlu0 0
  %56 = vperm.xlu0 %55, %v31
  %v57 = vpop.permute.xlu0 %56
  %60 = vset.pattern.permute.xlu0 0
  %61 = vperm.xlu0 %60, %v32
  %v62 = vpop.permute.xlu0 %61
  %v64 = vlaneseq
  %v65 = vshrl.u32 %v64, 7
  %v66 = vsub.s32 0, %v65
  %v67 = vrot.slane %v38, %v66
  %v68 = vmul.f32 %v42, %v67
  %v69 = vmul.f32 %v47, %v67
  %v70 = vmul.f32 %v52, %v67
  %v71 = vmul.f32 %v57, %v67
  %v72 = vmul.f32 %v62, %v67
  %74 = vset.pattern.permute.xlu0 0
  %75 = vperm.xlu0 %74, %v33
  %v76 = vpop.permute.xlu0 %75
  %79 = vset.pattern.permute.xlu0 0
  %80 = vperm.xlu0 %79, %v34
  %v81 = vpop.permute.xlu0 %80
  %84 = vset.pattern.permute.xlu0 0
  %85 = vperm.xlu0 %84, %v35
  %v86 = vpop.permute.xlu0 %85
  %89 = vset.pattern.permute.xlu0 0
  %90 = vperm.xlu0 %89, %v36
  %v91 = vpop.permute.xlu0 %90
  %94 = vset.pattern.permute.xlu0 0
  %95 = vperm.xlu0 %94, %v37
  %v96 = vpop.permute.xlu0 %95
  %v98 = vadd.f32 %v68, %v76
  %v99 = vadd.f32 %v69, %v81
  %v100 = vadd.f32 %v70, %v86
  %v101 = vadd.f32 %v71, %v91
  %v102 = vadd.f32 %v72, %v96
  %v103 = vmax.f32 %v98, 0.0
  %v104 = vmax.f32 %v99, 0.0
  %v105 = vmax.f32 %v100, 0.0
  %v106 = vmax.f32 %v101, 0.0
  %v107 = vmax.f32 %v102, 0.0
  %108 = vst [vmem:[#allocation2] sm:$0xff] %v103
  %109 = vst [vmem:[#allocation2 + $0x8] sm:$0xff] %v104
  %110 = vst [vmem:[#allocation2 + $0x10] sm:$0xff] %v105
  %111 = vst [vmem:[#allocation2 + $0x18] sm:$0xff] %v106
  %112 = vst [vmem:[#allocation2 + $0x20] sm:$0xff] %v107
  %v113 = vld [vmem:[%s0 + $0x1] sm:$0x1]
  %v114 = vlaneseq
  %v115 = vshrl.u32 %v114, 7
  %v116 = vsub.s32 0, %v115
  %v117 = vrot.slane %v113, %v116
  %v118 = vmul.f32 %v42, %v117
  %v119 = vmul.f32 %v47, %v117
  %v120 = vmul.f32 %v52, %v117
  %v121 = vmul.f32 %v57, %v117
  %v122 = vmul.f32 %v62, %v117
  %v123 = vadd.f32 %v118, %v76
  %v124 = vadd.f32 %v119, %v81
  %v125 = vadd.f32 %v120, %v86
  %v126 = vadd.f32 %v121, %v91
  %v127 = vadd.f32 %v122, %v96
  %v128 = vmax.f32 %v123, 0.0
  %v129 = vmax.f32 %v124, 0.0
  %v130 = vmax.f32 %v125, 0.0
  %v131 = vmax.f32 %v126, 0.0
  %v132 = vmax.f32 %v127, 0.0
  %133 = vst [vmem:[#allocation2 + $0x28] sm:$0xff] %v128
  %134 = vst [vmem:[#allocation2 + $0x30] sm:$0xff] %v129
  %135 = vst [vmem:[#allocation2 + $0x38] sm:$0xff] %v130
  %136 = vst [vmem:[#allocation2 + $0x40] sm:$0xff] %v131
  %137 = vst [vmem:[#allocation2 + $0x48] sm:$0xff] %v132
  %v138 = vld [vmem:[%s0 + $0x2] sm:$0x1]
  %v139 = vlaneseq
  %v140 = vshrl.u32 %v139, 7
  %v141 = vsub.s32 0, %v140
  %v142 = vrot.slane %v138, %v141
  %v143 = vmul.f32 %v42, %v142
  %v144 = vmul.f32 %v47, %v142
  %v145 = vmul.f32 %v52, %v142
  %v146 = vmul.f32 %v57, %v142
  %v147 = vmul.f32 %v62, %v142
  %v148 = vadd.f32 %v143, %v76
  %v149 = vadd.f32 %v144, %v81
  %v150 = vadd.f32 %v145, %v86
  %v151 = vadd.f32 %v146, %v91
  %v152 = vadd.f32 %v147, %v96
  %v153 = vmax.f32 %v148, 0.0
  %v154 = vmax.f32 %v149, 0.0
  %v155 = vmax.f32 %v150, 0.0
  %v156 = vmax.f32 %v151, 0.0
  %v157 = vmax.f32 %v152, 0.0
  %158 = vst [vmem:[#allocation2 + $0x50] sm:$0xff] %v153
  %159 = vst [vmem:[#allocation2 + $0x58] sm:$0xff] %v154
  %160 = vst [vmem:[#allocation2 + $0x60] sm:$0xff] %v155
  %161 = vst [vmem:[#allocation2 + $0x68] sm:$0xff] %v156
  %162 = vst [vmem:[#allocation2 + $0x70] sm:$0xff] %v157
  %v163 = vld [vmem:[%s0 + $0x3] sm:$0x1]
  %v164 = vlaneseq
  %v165 = vshrl.u32 %v164, 7
  %v166 = vsub.s32 0, %v165
  %v167 = vrot.slane %v163, %v166
  %v168 = vmul.f32 %v42, %v167
  %v169 = vmul.f32 %v47, %v167
  %v170 = vmul.f32 %v52, %v167
  %v171 = vmul.f32 %v57, %v167
  %v172 = vmul.f32 %v62, %v167
  %v173 = vadd.f32 %v168, %v76
  %v174 = vadd.f32 %v169, %v81
  %v175 = vadd.f32 %v170, %v86
  %v176 = vadd.f32 %v171, %v91
  %v177 = vadd.f32 %v172, %v96
  %v178 = vmax.f32 %v173, 0.0
  %v179 = vmax.f32 %v174, 0.0
  %v180 = vmax.f32 %v175, 0.0
  %v181 = vmax.f32 %v176, 0.0
  %v182 = vmax.f32 %v177, 0.0
  %183 = vst [vmem:[#allocation2 + $0x78] sm:$0xff] %v178
  %184 = vst [vmem:[#allocation2 + $0x80] sm:$0xff] %v179
  %185 = vst [vmem:[#allocation2 + $0x88] sm:$0xff] %v180
  %186 = vst [vmem:[#allocation2 + $0x90] sm:$0xff] %v181
  %187 = vst [vmem:[#allocation2 + $0x98] sm:$0xff] %v182
  %v188 = vld [vmem:[%s0 + $0x4] sm:$0x1]
  %v189 = vlaneseq
  %v190 = vshrl.u32 %v189, 7
  %v191 = vsub.s32 0, %v190
  %v192 = vrot.slane %v188, %v191
  %v193 = vmul.f32 %v42, %v192
  %v194 = vmul.f32 %v47, %v192
  %v195 = vmul.f32 %v52, %v192
  %v196 = vmul.f32 %v57, %v192
  %v197 = vmul.f32 %v62, %v192
  %v198 = vadd.f32 %v193, %v76
  %v199 = vadd.f32 %v194, %v81
  %v200 = vadd.f32 %v195, %v86
  %v201 = vadd.f32 %v196, %v91
  %v202 = vadd.f32 %v197, %v96
  %v203 = vmax.f32 %v198, 0.0
  %v204 = vmax.f32 %v199, 0.0
  %v205 = vmax.f32 %v200, 0.0
  %v206 = vmax.f32 %v201, 0.0
  %v207 = vmax.f32 %v202, 0.0
  %208 = vst [vmem:[#allocation2 + $0xa0] sm:$0xff] %v203
  %209 = vst [vmem:[#allocation2 + $0xa8] sm:$0xff] %v204
  %210 = vst [vmem:[#allocation2 + $0xb0] sm:$0xff] %v205
  %211 = vst [vmem:[#allocation2 + $0xb8] sm:$0xff] %v206
  %212 = vst [vmem:[#allocation2 + $0xc0] sm:$0xff] %v207
  %v213 = vld [vmem:[%s0 + $0x5] sm:$0x1]
  %v214 = vlaneseq
  %v215 = vshrl.u32 %v214, 7
  %v216 = vsub.s32 0, %v215
  %v217 = vrot.slane %v213, %v216
  %v218 = vmul.f32 %v42, %v217
  %v219 = vmul.f32 %v47, %v217
  %v220 = vmul.f32 %v52, %v217
  %v221 = vmul.f32 %v57, %v217
  %v222 = vmul.f32 %v62, %v217
  %v223 = vadd.f32 %v218, %v76
  %v224 = vadd.f32 %v219, %v81
  %v225 = vadd.f32 %v220, %v86
  %v226 = vadd.f32 %v221, %v91
  %v227 = vadd.f32 %v222, %v96
  %v228 = vmax.f32 %v223, 0.0
  %v229 = vmax.f32 %v224, 0.0
  %v230 = vmax.f32 %v225, 0.0
  %v231 = vmax.f32 %v226, 0.0
  %v232 = vmax.f32 %v227, 0.0
  %233 = vst [vmem:[#allocation2 + $0xc8] sm:$0xff] %v228
  %234 = vst [vmem:[#allocation2 + $0xd0] sm:$0xff] %v229
  %235 = vst [vmem:[#allocation2 + $0xd8] sm:$0xff] %v230
  %236 = vst [vmem:[#allocation2 + $0xe0] sm:$0xff] %v231
  %237 = vst [vmem:[#allocation2 + $0xe8] sm:$0xff] %v232
  %v238 = vld [vmem:[#allocation2] sm:$0xff]
  %v239 = vld [vmem:[#allocation2 + $0x8] sm:$0xff]
  %v240 = vld [vmem:[#allocation2 + $0x10] sm:$0xff]
  %v241 = vld [vmem:[#allocation2 + $0x18] sm:$0xff]
  %v242 = vld [vmem:[#allocation2 + $0x20] sm:$0xff]
  %v243 = vld [vmem:[#allocation2 + $0x28] sm:$0xff]
  %v244 = vld [vmem:[#allocation2 + $0x30] sm:$0xff]
  %v245 = vld [vmem:[#allocation2 + $0x38] sm:$0xff]
  %v246 = vld [vmem:[#allocation2 + $0x40] sm:$0xff]
  %v247 = vld [vmem:[#allocation2 + $0x48] sm:$0xff]
  %v248 = vld [vmem:[#allocation2 + $0x50] sm:$0xff]
  %v249 = vld [vmem:[#allocation2 + $0x58] sm:$0xff]
  %v250 = vld [vmem:[#allocation2 + $0x60] sm:$0xff]
  %v251 = vld [vmem:[#allocation2 + $0x68] sm:$0xff]
  %v252 = vld [vmem:[#allocation2 + $0x70] sm:$0xff]
  %v253 = vld [vmem:[#allocation2 + $0x78] sm:$0xff]
  %v254 = vld [vmem:[#allocation2 + $0x80] sm:$0xff]
  %v255 = vld [vmem:[#allocation2 + $0x88] sm:$0xff]
  %v256 = vld [vmem:[#allocation2 + $0x90] sm:$0xff]
  %v257 = vld [vmem:[#allocation2 + $0x98] sm:$0xff]
  %v258 = vld [vmem:[#allocation2 + $0xa0] sm:$0xff]
  %v259 = vld [vmem:[#allocation2 + $0xa8] sm:$0xff]
  %v260 = vld [vmem:[#allocation2 + $0xb0] sm:$0xff]
  %v261 = vld [vmem:[#allocation2 + $0xb8] sm:$0xff]
  %v262 = vld [vmem:[#allocation2 + $0xc0] sm:$0xff]
  %v263 = vld [vmem:[#allocation2 + $0xc8] sm:$0xff]
  %v264 = vld [vmem:[#allocation2 + $0xd0] sm:$0xff]
  %v265 = vld [vmem:[#allocation2 + $0xd8] sm:$0xff]
  %v266 = vld [vmem:[#allocation2 + $0xe0] sm:$0xff]
  %v267 = vld [vmem:[#allocation2 + $0xe8] sm:$0xff]
  %v268 = vld [vmem:[%s3] sm:$0xff]
  %v269 = vld [vmem:[%s3 + $0x8] sm:$0xff]
  %v270 = vld [vmem:[%s3 + $0x10] sm:$0xff]
  %v271 = vld [vmem:[%s3 + $0x18] sm:$0xff]
  %v272 = vld [vmem:[%s3 + $0x20] sm:$0xff]
  %v273 = vld [vmem:[%s3 + $0x28] sm:$0xff]
  %v274 = vld [vmem:[%s3 + $0x30] sm:$0xff]
  %v275 = vld [vmem:[%s3 + $0x38] sm:$0xff]
  %v276 = vld [vmem:[%s3 + $0x40] sm:$0xff]
  %v277 = vld [vmem:[%s3 + $0x48] sm:$0xff]
  %v278 = vld [vmem:[%s3 + $0x50] sm:$0xff]
  %v279 = vld [vmem:[%s3 + $0x58] sm:$0xff]
  %v280 = vld [vmem:[%s3 + $0x60] sm:$0xff]
  %v281 = vld [vmem:[%s3 + $0x68] sm:$0xff]
  %v282 = vld [vmem:[%s3 + $0x70] sm:$0xff]
  %v283 = vld [vmem:[%s3 + $0x78] sm:$0xff]
  %v284 = vld [vmem:[%s3 + $0x80] sm:$0xff]
  %v285 = vld [vmem:[%s3 + $0x88] sm:$0xff]
  %v286 = vld [vmem:[%s3 + $0x90] sm:$0xff]
  %v287 = vld [vmem:[%s3 + $0x98] sm:$0xff]
  %v288 = vld [vmem:[%s3 + $0xa0] sm:$0xff]
  %v289 = vld [vmem:[%s3 + $0xa8] sm:$0xff]
  %v290 = vld [vmem:[%s3 + $0xb0] sm:$0xff]
  %v291 = vld [vmem:[%s3 + $0xb8] sm:$0xff]
  %v292 = vld [vmem:[%s3 + $0xc0] sm:$0xff]
  %v293 = vld [vmem:[%s3 + $0xc8] sm:$0xff]
  %v294 = vld [vmem:[%s3 + $0xd0] sm:$0xff]
  %v295 = vld [vmem:[%s3 + $0xd8] sm:$0xff]
  %v296 = vld [vmem:[%s3 + $0xe0] sm:$0xff]
  %v297 = vld [vmem:[%s3 + $0xe8] sm:$0xff]
  %v298 = vld [vmem:[%s3 + $0xf0] sm:$0xff]
  %v299 = vld [vmem:[%s3 + $0xf8] sm:$0xff]
  %v300 = vld [vmem:[%s3 + $0x100] sm:$0xff]
  %v301 = vld [vmem:[%s3 + $0x108] sm:$0xff]
  %v302 = vld [vmem:[%s3 + $0x110] sm:$0xff]
  %v303 = vld [vmem:[%s3 + $0x118] sm:$0xff]
  %v304 = vld [vmem:[%s3 + $0x120] sm:$0xff]
  %v305 = vld [vmem:[%s3 + $0x128] sm:$0xff]
  %v306 = vld [vmem:[%s3 + $0x130] sm:$0xff]
  %v307 = vld [vmem:[%s3 + $0x138] sm:$0xff]
  %v308 = vld [vmem:[%s3 + $0x140] sm:$0xff]
  %v309 = vld [vmem:[%s3 + $0x148] sm:$0xff]
  %v310 = vld [vmem:[%s3 + $0x150] sm:$0xff]
  %v311 = vld [vmem:[%s3 + $0x158] sm:$0xff]
  %v312 = vld [vmem:[%s3 + $0x160] sm:$0xff]
  %v313 = vld [vmem:[%s3 + $0x168] sm:$0xff]
  %v314 = vld [vmem:[%s3 + $0x170] sm:$0xff]
  %v315 = vld [vmem:[%s3 + $0x178] sm:$0xff]
  %v316 = vld [vmem:[%s3 + $0x180] sm:$0xff]
  %v317 = vld [vmem:[%s3 + $0x188] sm:$0xff]
  %v318 = vld [vmem:[%s3 + $0x190] sm:$0xff]
  %v319 = vld [vmem:[%s3 + $0x198] sm:$0xff]
  %v320 = vld [vmem:[%s3 + $0x1a0] sm:$0xff]
  %v321 = vld [vmem:[%s3 + $0x1a8] sm:$0xff]
  %v322 = vld [vmem:[%s3 + $0x1b0] sm:$0xff]
  %v323 = vld [vmem:[%s3 + $0x1b8] sm:$0xff]
  %v324 = vld [vmem:[%s3 + $0x1c0] sm:$0xff]
  %v325 = vld [vmem:[%s3 + $0x1c8] sm:$0xff]
  %v326 = vld [vmem:[%s3 + $0x1d0] sm:$0xff]
  %v327 = vld [vmem:[%s3 + $0x1d8] sm:$0xff]
  %v328 = vld [vmem:[%s4] sm:$0xff]
  %v329 = vld [vmem:[%s4 + $0x8] sm:$0xff]
  %v330 = vld [vmem:[%s4 + $0x10] sm:$0xff]
  %v331 = vld [vmem:[%s4 + $0x18] sm:$0xff]
  %v332 = vld [vmem:[%s4 + $0x20] sm:$0xff]
  %v333 = vld [vmem:[%s4 + $0x28] sm:$0xff]
  %v334 = vld [vmem:[%s4 + $0x30] sm:$0xff]
  %v335 = vld [vmem:[%s4 + $0x38] sm:$0xff]
  %v336 = vld [vmem:[%s4 + $0x40] sm:$0xff]
  %v337 = vld [vmem:[%s4 + $0x48] sm:$0xff]
  %v338 = vld [vmem:[%s4 + $0x50] sm:$0xff]
  %v339 = vld [vmem:[%s4 + $0x58] sm:$0xff]
  %v340 = vld [vmem:[%s4 + $0x60] sm:$0xff]
  %v341 = vld [vmem:[%s4 + $0x68] sm:$0xff]
  %v342 = vld [vmem:[%s4 + $0x70] sm:$0xff]
  %v343 = vld [vmem:[%s4 + $0x78] sm:$0xff]
  %v344 = vld [vmem:[%s4 + $0x80] sm:$0xff]
  %v345 = vld [vmem:[%s4 + $0x88] sm:$0xff]
  %v346 = vld [vmem:[%s4 + $0x90] sm:$0xff]
  %v347 = vld [vmem:[%s4 + $0x98] sm:$0xff]
  %v348 = vld [vmem:[%s4 + $0xa0] sm:$0xff]
  %v349 = vld [vmem:[%s4 + $0xa8] sm:$0xff]
  %v350 = vld [vmem:[%s4 + $0xb0] sm:$0xff]
  %v351 = vld [vmem:[%s4 + $0xb8] sm:$0xff]
  %v352 = vld [vmem:[%s4 + $0xc0] sm:$0xff]
  %v353 = vld [vmem:[%s4 + $0xc8] sm:$0xff]
  %v354 = vld [vmem:[%s4 + $0xd0] sm:$0xff]
  %v355 = vld [vmem:[%s4 + $0xd8] sm:$0xff]
  %v356 = vld [vmem:[%s4 + $0xe0] sm:$0xff]
  %v357 = vld [vmem:[%s4 + $0xe8] sm:$0xff]
  %359 = vset.pattern.permute.xlu0 0
  %360 = vperm.xlu0 %359, %v328
  %v361 = vpop.permute.xlu0 %360
  %364 = vset.pattern.permute.xlu0 0
  %365 = vperm.xlu0 %364, %v329
  %v366 = vpop.permute.xlu0 %365
  %369 = vset.pattern.permute.xlu0 0
  %370 = vperm.xlu0 %369, %v330
  %v371 = vpop.permute.xlu0 %370
  %374 = vset.pattern.permute.xlu0 0
  %375 = vperm.xlu0 %374, %v331
  %v376 = vpop.permute.xlu0 %375
  %379 = vset.pattern.permute.xlu0 0
  %380 = vperm.xlu0 %379, %v332
  %v381 = vpop.permute.xlu0 %380
  %384 = vset.pattern.permute.xlu0 0
  %385 = vperm.xlu0 %384, %v333
  %v386 = vpop.permute.xlu0 %385
  %389 = vset.pattern.permute.xlu0 0
  %390 = vperm.xlu0 %389, %v334
  %v391 = vpop.permute.xlu0 %390
  %394 = vset.pattern.permute.xlu0 0
  %395 = vperm.xlu0 %394, %v335
  %v396 = vpop.permute.xlu0 %395
  %399 = vset.pattern.permute.xlu0 0
  %400 = vperm.xlu0 %399, %v336
  %v401 = vpop.permute.xlu0 %400
  %404 = vset.pattern.permute.xlu0 0
  %405 = vperm.xlu0 %404, %v337
  %v406 = vpop.permute.xlu0 %405
  %409 = vset.pattern.permute.xlu0 0
  %410 = vperm.xlu0 %409, %v338
  %v411 = vpop.permute.xlu0 %410
  %414 = vset.pattern.permute.xlu0 0
  %415 = vperm.xlu0 %414, %v339
  %v416 = vpop.permute.xlu0 %415
  %419 = vset.pattern.permute.xlu0 0
  %420 = vperm.xlu0 %419, %v340
  %v421 = vpop.permute.xlu0 %420
  %424 = vset.pattern.permute.xlu0 0
  %425 = vperm.xlu0 %424, %v341
  %v426 = vpop.permute.xlu0 %425
  %429 = vset.pattern.permute.xlu0 0
  %430 = vperm.xlu0 %429, %v342
  %v431 = vpop.permute.xlu0 %430
  %434 = vset.pattern.permute.xlu0 0
  %435 = vperm.xlu0 %434, %v343
  %v436 = vpop.permute.xlu0 %435
  %439 = vset.pattern.permute.xlu0 0
  %440 = vperm.xlu0 %439, %v344
  %v441 = vpop.permute.xlu0 %440
  %444 = vset.pattern.permute.xlu0 0
  %445 = vperm.xlu0 %444, %v345
  %v446 = vpop.permute.xlu0 %445
  %449 = vset.pattern.permute.xlu0 0
  %450 = vperm.xlu0 %449, %v346
  %v451 = vpop.permute.xlu0 %450
  %454 = vset.pattern.permute.xlu0 0
  %455 = vperm.xlu0 %454, %v347
  %v456 = vpop.permute.xlu0 %455
  %459 = vset.pattern.permute.xlu0 0
  %460 = vperm.xlu0 %459, %v348
  %v461 = vpop.permute.xlu0 %460
  %464 = vset.pattern.permute.xlu0 0
  %465 = vperm.xlu0 %464, %v349
  %v466 = vpop.permute.xlu0 %465
  %469 = vset.pattern.permute.xlu0 0
  %470 = vperm.xlu0 %469, %v350
  %v471 = vpop.permute.xlu0 %470
  %474 = vset.pattern.permute.xlu0 0
  %475 = vperm.xlu0 %474, %v351
  %v476 = vpop.permute.xlu0 %475
  %479 = vset.pattern.permute.xlu0 0
  %480 = vperm.xlu0 %479, %v352
  %v481 = vpop.permute.xlu0 %480
  %484 = vset.pattern.permute.xlu0 0
  %485 = vperm.xlu0 %484, %v353
  %v486 = vpop.permute.xlu0 %485
  %489 = vset.pattern.permute.xlu0 0
  %490 = vperm.xlu0 %489, %v354
  %v491 = vpop.permute.xlu0 %490
  %494 = vset.pattern.permute.xlu0 0
  %495 = vperm.xlu0 %494, %v355
  %v496 = vpop.permute.xlu0 %495
  %499 = vset.pattern.permute.xlu0 0
  %500 = vperm.xlu0 %499, %v356
  %v501 = vpop.permute.xlu0 %500
  %504 = vset.pattern.permute.xlu0 0
  %505 = vperm.xlu0 %504, %v357
  %v506 = vpop.permute.xlu0 %505
  %vm508 = vcmask 916480
  %v510 = vsel %vm508, %v269, 0
  %v513 = vsel %vm508, %v271, 0
  %v516 = vsel %vm508, %v273, 0
  %v519 = vsel %vm508, %v275, 0
  %v522 = vsel %vm508, %v277, 0
  %v525 = vsel %vm508, %v279, 0
  %v528 = vsel %vm508, %v281, 0
  %v531 = vsel %vm508, %v283, 0
  %v534 = vsel %vm508, %v285, 0
  %v537 = vsel %vm508, %v287, 0
  %v540 = vsel %vm508, %v289, 0
  %v543 = vsel %vm508, %v291, 0
  %v546 = vsel %vm508, %v293, 0
  %v549 = vsel %vm508, %v295, 0
  %v552 = vsel %vm508, %v297, 0
  %v555 = vsel %vm508, %v299, 0
  %v558 = vsel %vm508, %v301, 0
  %v561 = vsel %vm508, %v303, 0
  %v564 = vsel %vm508, %v305, 0
  %v567 = vsel %vm508, %v307, 0
  %v570 = vsel %vm508, %v309, 0
  %v573 = vsel %vm508, %v311, 0
  %v576 = vsel %vm508, %v313, 0
  %v579 = vsel %vm508, %v315, 0
  %v582 = vsel %vm508, %v317, 0
  %v585 = vsel %vm508, %v319, 0
  %v588 = vsel %vm508, %v321, 0
  %v591 = vsel %vm508, %v323, 0
  %v594 = vsel %vm508, %v325, 0
  %v597 = vsel %vm508, %v327, 0
  %599 = vmatprep.subr.mxu0 0.0
  %600 = vmatpush1.msra.mxu0 %v238
  %601 = vmatprep.subr.mxu0 0.0
  %602 = vmatpush1.msra.mxu0 %v239
  %603 = vmatprep.subr.mxu0 0.0
  %604 = vmatpush1.msra.mxu0 %v240
  %605 = vmatprep.subr.mxu0 0.0
  %606 = vmatpush1.msra.mxu0 %v241
  %607 = vmatprep.subr.mxu0 0.0
  %608 = vmatpush1.msra.mxu0 %v242
  %609 = vmatprep.subr.mxu0 0.0
  %610 = vmatpush1.msra.mxu0 %v243
  %611 = vmatprep.subr.mxu0 0.0
  %612 = vmatpush1.msra.mxu0 %v244
  %613 = vmatprep.subr.mxu0 0.0
  %614 = vmatpush1.msra.mxu0 %v245
  %615 = vmatprep.subr.mxu0 0.0
  %616 = vmatpush1.msra.mxu0 %v246
  %617 = vmatprep.subr.mxu0 0.0
  %618 = vmatpush1.msra.mxu0 %v247
  %619 = vmatprep.subr.mxu0 0.0
  %620 = vmatpush1.msra.mxu0 %v248
  %621 = vmatprep.subr.mxu0 0.0
  %622 = vmatpush1.msra.mxu0 %v249
  %623 = vmatprep.subr.mxu0 0.0
  %624 = vmatpush1.msra.mxu0 %v250
  %625 = vmatprep.subr.mxu0 0.0
  %626 = vmatpush1.msra.mxu0 %v251
  %627 = vmatprep.subr.mxu0 0.0
  %628 = vmatpush1.msra.mxu0 %v252
  %629 = vmatprep.subr.mxu0 0.0
  %630 = vmatpush1.msra.mxu0 %v253
  %631 = vmatprep.subr.mxu0 0.0
  %632 = vmatpush1.msra.mxu0 %v254
  %633 = vmatprep.subr.mxu0 0.0
  %634 = vmatpush1.msra.mxu0 %v255
  %635 = vmatprep.subr.mxu0 0.0
  %636 = vmatpush1.msra.mxu0 %v256
  %637 = vmatprep.subr.mxu0 0.0
  %638 = vmatpush1.msra.mxu0 %v257
  %639 = vmatprep.subr.mxu0 0.0
  %640 = vmatpush1.msra.mxu0 %v258
  %641 = vmatprep.subr.mxu0 0.0
  %642 = vmatpush1.msra.mxu0 %v259
  %643 = vmatprep.subr.mxu0 0.0
  %644 = vmatpush1.msra.mxu0 %v260
  %645 = vmatprep.subr.mxu0 0.0
  %646 = vmatpush1.msra.mxu0 %v261
  %647 = vmatprep.subr.mxu0 0.0
  %648 = vmatpush1.msra.mxu0 %v262
  %649 = vmatprep.subr.mxu0 0.0
  %650 = vmatpush1.msra.mxu0 %v263
  %651 = vmatprep.subr.mxu0 0.0
  %652 = vmatpush1.msra.mxu0 %v264
  %653 = vmatprep.subr.mxu0 0.0
  %654 = vmatpush1.msra.mxu0 %v265
  %655 = vmatprep.subr.mxu0 0.0
  %656 = vmatpush1.msra.mxu0 %v266
  %657 = vmatprep.subr.mxu0 0.0
  %658 = vmatpush1.msra.mxu0 %v267
  %659 = vmatprep.subr.mxu0 0.0
  %660 = vmatpush1.msra.mxu0 0.0
  %661 = vmatprep.subr.mxu0 0.0
  %662 = vmatpush1.msra.mxu0 0.0
  %663 = vmatprep.mubr.f32.mxu0 %v510
  %664 = vmatmul.mubr.f32.gmra.mrb[0].mxu0 %v268
  %v665 = vpop.f32.mrb[0].mxu0
  %v666 = vadd.f32 %v361, %v665
  %v667 = vpop.f32.mrb[0].mxu0
  %668 = vmatprep.mubr.f32.mxu0 %v513
  %669 = vmatmul.mubr.f32.gmra.mrb[0].mxu0 %v270
  %v670 = vpop.f32.mrb[0].mxu0
  %v671 = vadd.f32 %v366, %v670
  %v672 = vpop.f32.mrb[0].mxu0
  %673 = vmatprep.mubr.f32.mxu0 %v516
  %674 = vmatmul.mubr.f32.gmra.mrb[0].mxu0 %v272
  %v675 = vpop.f32.mrb[0].mxu0
  %v676 = vadd.f32 %v371, %v675
  %v677 = vpop.f32.mrb[0].mxu0
  %678 = vmatprep.mubr.f32.mxu0 %v519
  %679 = vmatmul.mubr.f32.gmra.mrb[0].mxu0 %v274
  %v680 = vpop.f32.mrb[0].mxu0
  %v681 = vadd.f32 %v376, %v680
  %v682 = vpop.f32.mrb[0].mxu0
  %683 = vmatprep.mubr.f32.mxu0 %v522
  %684 = vmatmul.mubr.f32.gmra.mrb[0].mxu0 %v276
  %v685 = vpop.f32.mrb[0].mxu0
  %v686 = vadd.f32 %v381, %v685
  %v687 = vpop.f32.mrb[0].mxu0
  %688 = vmatprep.mubr.f32.mxu0 %v525
  %689 = vmatmul.mubr.f32.gmra.mrb[0].mxu0 %v278
  %v690 = vpop.f32.mrb[0].mxu0
  %v691 = vadd.f32 %v386, %v690
  %v692 = vpop.f32.mrb[0].mxu0
  %693 = vmatprep.mubr.f32.mxu0 %v528
  %694 = vmatmul.mubr.f32.gmra.mrb[0].mxu0 %v280
  %v695 = vpop.f32.mrb[0].mxu0
  %v696 = vadd.f32 %v391, %v695
  %v697 = vpop.f32.mrb[0].mxu0
  %698 = vmatprep.mubr.f32.mxu0 %v531
  %699 = vmatmul.mubr.f32.gmra.mrb[0].mxu0 %v282
  %v700 = vpop.f32.mrb[0].mxu0
  %v701 = vadd.f32 %v396, %v700
  %v702 = vpop.f32.mrb[0].mxu0
  %703 = vmatprep.mubr.f32.mxu0 %v534
  %704 = vmatmul.mubr.f32.gmra.mrb[0].mxu0 %v284
  %v705 = vpop.f32.mrb[0].mxu0
  %v706 = vadd.f32 %v401, %v705
  %v707 = vpop.f32.mrb[0].mxu0
  %708 = vmatprep.mubr.f32.mxu0 %v537
  %709 = vmatmul.mubr.f32.gmra.mrb[0].mxu0 %v286
  %v710 = vpop.f32.mrb[0].mxu0
  %v711 = vadd.f32 %v406, %v710
  %v712 = vpop.f32.mrb[0].mxu0
  %713 = vmatprep.mubr.f32.mxu0 %v540
  %714 = vmatmul.mubr.f32.gmra.mrb[0].mxu0 %v288
  %v715 = vpop.f32.mrb[0].mxu0
  %v716 = vadd.f32 %v411, %v715
  %v717 = vpop.f32.mrb[0].mxu0
  %718 = vmatprep.mubr.f32.mxu0 %v543
  %719 = vmatmul.mubr.f32.gmra.mrb[0].mxu0 %v290
  %v720 = vpop.f32.mrb[0].mxu0
  %v721 = vadd.f32 %v416, %v720
  %v722 = vpop.f32.mrb[0].mxu0
  %723 = vmatprep.mubr.f32.mxu0 %v546
  %724 = vmatmul.mubr.f32.gmra.mrb[0].mxu0 %v292
  %v725 = vpop.f32.mrb[0].mxu0
  %v726 = vadd.f32 %v421, %v725
  %v727 = vpop.f32.mrb[0].mxu0
  %728 = vmatprep.mubr.f32.mxu0 %v549
  %729 = vmatmul.mubr.f32.gmra.mrb[0].mxu0 %v294
  %v730 = vpop.f32.mrb[0].mxu0
  %v731 = vadd.f32 %v426, %v730
  %v732 = vpop.f32.mrb[0].mxu0
  %733 = vmatprep.mubr.f32.mxu0 %v552
  %734 = vmatmul.mubr.f32.gmra.mrb[0].mxu0 %v296
  %v735 = vpop.f32.mrb[0].mxu0
  %v736 = vadd.f32 %v431, %v735
  %v737 = vpop.f32.mrb[0].mxu0
  %738 = vmatprep.mubr.f32.mxu0 %v555
  %739 = vmatmul.mubr.f32.gmra.mrb[0].mxu0 %v298
  %v740 = vpop.f32.mrb[0].mxu0
  %v741 = vadd.f32 %v436, %v740
  %v742 = vpop.f32.mrb[0].mxu0
  %743 = vmatprep.mubr.f32.mxu0 %v558
  %744 = vmatmul.mubr.f32.gmra.mrb[0].mxu0 %v300
  %v745 = vpop.f32.mrb[0].mxu0
  %v746 = vadd.f32 %v441, %v745
  %v747 = vpop.f32.mrb[0].mxu0
  %748 = vmatprep.mubr.f32.mxu0 %v561
  %749 = vmatmul.mubr.f32.gmra.mrb[0].mxu0 %v302
  %v750 = vpop.f32.mrb[0].mxu0
  %v751 = vadd.f32 %v446, %v750
  %v752 = vpop.f32.mrb[0].mxu0
  %753 = vmatprep.mubr.f32.mxu0 %v564
  %754 = vmatmul.mubr.f32.gmra.mrb[0].mxu0 %v304
  %v755 = vpop.f32.mrb[0].mxu0
  %v756 = vadd.f32 %v451, %v755
  %v757 = vpop.f32.mrb[0].mxu0
  %758 = vmatprep.mubr.f32.mxu0 %v567
  %759 = vmatmul.mubr.f32.gmra.mrb[0].mxu0 %v306
  %v760 = vpop.f32.mrb[0].mxu0
  %v761 = vadd.f32 %v456, %v760
  %v762 = vpop.f32.mrb[0].mxu0
  %763 = vmatprep.mubr.f32.mxu0 %v570
  %764 = vmatmul.mubr.f32.gmra.mrb[0].mxu0 %v308
  %v765 = vpop.f32.mrb[0].mxu0
  %v766 = vadd.f32 %v461, %v765
  %v767 = vpop.f32.mrb[0].mxu0
  %768 = vmatprep.mubr.f32.mxu0 %v573
  %769 = vmatmul.mubr.f32.gmra.mrb[0].mxu0 %v310
  %v770 = vpop.f32.mrb[0].mxu0
  %v771 = vadd.f32 %v466, %v770
  %v772 = vpop.f32.mrb[0].mxu0
  %773 = vmatprep.mubr.f32.mxu0 %v576
  %774 = vmatmul.mubr.f32.gmra.mrb[0].mxu0 %v312
  %v775 = vpop.f32.mrb[0].mxu0
  %v776 = vadd.f32 %v471, %v775
  %v777 = vpop.f32.mrb[0].mxu0
  %778 = vmatprep.mubr.f32.mxu0 %v579
  %779 = vmatmul.mubr.f32.gmra.mrb[0].mxu0 %v314
  %v780 = vpop.f32.mrb[0].mxu0
  %v781 = vadd.f32 %v476, %v780
  %v782 = vpop.f32.mrb[0].mxu0
  %783 = vmatprep.mubr.f32.mxu0 %v582
  %784 = vmatmul.mubr.f32.gmra.mrb[0].mxu0 %v316
  %v785 = vpop.f32.mrb[0].mxu0
  %v786 = vadd.f32 %v481, %v785
  %v787 = vpop.f32.mrb[0].mxu0
  %788 = vmatprep.mubr.f32.mxu0 %v585
  %789 = vmatmul.mubr.f32.gmra.mrb[0].mxu0 %v318
  %v790 = vpop.f32.mrb[0].mxu0
  %v791 = vadd.f32 %v486, %v790
  %v792 = vpop.f32.mrb[0].mxu0
  %793 = vmatprep.mubr.f32.mxu0 %v588
  %794 = vmatmul.mubr.f32.gmra.mrb[0].mxu0 %v320
  %v795 = vpop.f32.mrb[0].mxu0
  %v796 = vadd.f32 %v491, %v795
  %v797 = vpop.f32.mrb[0].mxu0
  %798 = vmatprep.mubr.f32.mxu0 %v591
  %799 = vmatmul.mubr.f32.gmra.mrb[0].mxu0 %v322
  %v800 = vpop.f32.mrb[0].mxu0
  %v801 = vadd.f32 %v496, %v800
  %v802 = vpop.f32.mrb[0].mxu0
  %803 = vmatprep.mubr.f32.mxu0 %v594
  %804 = vmatmul.mubr.f32.gmra.mrb[0].mxu0 %v324
  %v805 = vpop.f32.mrb[0].mxu0
  %v806 = vadd.f32 %v501, %v805
  %v807 = vpop.f32.mrb[0].mxu0
  %808 = vmatprep.mubr.f32.mxu0 %v597
  %809 = vmatmul.mubr.f32.gmra.mrb[0].mxu0 %v326
  %v810 = vpop.f32.mrb[0].mxu0
  %v811 = vadd.f32 %v506, %v810
  %v812 = vpop.f32.mrb[0].mxu0
  %813 = vdwg.mxu0
  %v814 = vmax.f32 %v666, 0.0
  %v815 = vmax.f32 %v671, 0.0
  %v816 = vmax.f32 %v676, 0.0
  %v817 = vmax.f32 %v681, 0.0
  %v818 = vmax.f32 %v686, 0.0
  %v819 = vmax.f32 %v691, 0.0
  %v820 = vmax.f32 %v696, 0.0
  %v821 = vmax.f32 %v701, 0.0
  %v822 = vmax.f32 %v706, 0.0
  %v823 = vmax.f32 %v711, 0.0
  %v824 = vmax.f32 %v716, 0.0
  %v825 = vmax.f32 %v721, 0.0
  %v826 = vmax.f32 %v726, 0.0
  %v827 = vmax.f32 %v731, 0.0
  %v828 = vmax.f32 %v736, 0.0
  %v829 = vmax.f32 %v741, 0.0
  %v830 = vmax.f32 %v746, 0.0
  %v831 = vmax.f32 %v751, 0.0
  %v832 = vmax.f32 %v756, 0.0
  %v833 = vmax.f32 %v761, 0.0
  %v834 = vmax.f32 %v766, 0.0
  %v835 = vmax.f32 %v771, 0.0
  %v836 = vmax.f32 %v776, 0.0
  %v837 = vmax.f32 %v781, 0.0
  %v838 = vmax.f32 %v786, 0.0
  %v839 = vmax.f32 %v791, 0.0
  %v840 = vmax.f32 %v796, 0.0
  %v841 = vmax.f32 %v801, 0.0
  %v842 = vmax.f32 %v806, 0.0
  %v843 = vmax.f32 %v811, 0.0
  %v844 = vld [vmem:[%s5] sm:$0xff]
  %v845 = vld [vmem:[%s5 + $0x8] sm:$0xff]
  %v846 = vld [vmem:[%s5 + $0x10] sm:$0xff]
  %v847 = vld [vmem:[%s5 + $0x18] sm:$0xff]
  %v848 = vld [vmem:[%s5 + $0x20] sm:$0xff]
  %v849 = vld [vmem:[%s5 + $0x28] sm:$0xff]
  %v850 = vld [vmem:[%s5 + $0x30] sm:$0xff]
  %v851 = vld [vmem:[%s5 + $0x38] sm:$0xff]
  %v852 = vld [vmem:[%s5 + $0x40] sm:$0xff]
  %v853 = vld [vmem:[%s5 + $0x48] sm:$0xff]
  %v854 = vld [vmem:[%s5 + $0x50] sm:$0xff]
  %v855 = vld [vmem:[%s5 + $0x58] sm:$0xff]
  %v856 = vld [vmem:[%s5 + $0x60] sm:$0xff]
  %v857 = vld [vmem:[%s5 + $0x68] sm:$0xff]
  %v858 = vld [vmem:[%s5 + $0x70] sm:$0xff]
  %v859 = vld [vmem:[%s5 + $0x78] sm:$0xff]
  %v860 = vld [vmem:[%s5 + $0x80] sm:$0xff]
  %v861 = vld [vmem:[%s5 + $0x88] sm:$0xff]
  %v862 = vld [vmem:[%s5 + $0x90] sm:$0xff]
  %v863 = vld [vmem:[%s5 + $0x98] sm:$0xff]
  %v864 = vld [vmem:[%s5 + $0xa0] sm:$0xff]
  %v865 = vld [vmem:[%s5 + $0xa8] sm:$0xff]
  %v866 = vld [vmem:[%s5 + $0xb0] sm:$0xff]
  %v867 = vld [vmem:[%s5 + $0xb8] sm:$0xff]
  %v868 = vld [vmem:[%s5 + $0xc0] sm:$0xff]
  %v869 = vld [vmem:[%s5 + $0xc8] sm:$0xff]
  %v870 = vld [vmem:[%s5 + $0xd0] sm:$0xff]
  %v871 = vld [vmem:[%s5 + $0xd8] sm:$0xff]
  %v872 = vld [vmem:[%s5 + $0xe0] sm:$0xff]
  %v873 = vld [vmem:[%s5 + $0xe8] sm:$0xff]
  %875 = vset.pattern.permute.xlu0 0
  %876 = vperm.xlu0 %875, %v844
  %v877 = vpop.permute.xlu0 %876
  %880 = vset.pattern.permute.xlu0 0
  %881 = vperm.xlu0 %880, %v845
  %v882 = vpop.permute.xlu0 %881
  %885 = vset.pattern.permute.xlu0 0
  %886 = vperm.xlu0 %885, %v846
  %v887 = vpop.permute.xlu0 %886
  %890 = vset.pattern.permute.xlu0 0
  %891 = vperm.xlu0 %890, %v847
  %v892 = vpop.permute.xlu0 %891
  %895 = vset.pattern.permute.xlu0 0
  %896 = vperm.xlu0 %895, %v848
  %v897 = vpop.permute.xlu0 %896
  %900 = vset.pattern.permute.xlu0 0
  %901 = vperm.xlu0 %900, %v849
  %v902 = vpop.permute.xlu0 %901
  %905 = vset.pattern.permute.xlu0 0
  %906 = vperm.xlu0 %905, %v850
  %v907 = vpop.permute.xlu0 %906
  %910 = vset.pattern.permute.xlu0 0
  %911 = vperm.xlu0 %910, %v851
  %v912 = vpop.permute.xlu0 %911
  %915 = vset.pattern.permute.xlu0 0
  %916 = vperm.xlu0 %915, %v852
  %v917 = vpop.permute.xlu0 %916
  %920 = vset.pattern.permute.xlu0 0
  %921 = vperm.xlu0 %920, %v853
  %v922 = vpop.permute.xlu0 %921
  %925 = vset.pattern.permute.xlu0 0
  %926 = vperm.xlu0 %925, %v854
  %v927 = vpop.permute.xlu0 %926
  %930 = vset.pattern.permute.xlu0 0
  %931 = vperm.xlu0 %930, %v855
  %v932 = vpop.permute.xlu0 %931
  %935 = vset.pattern.permute.xlu0 0
  %936 = vperm.xlu0 %935, %v856
  %v937 = vpop.permute.xlu0 %936
  %940 = vset.pattern.permute.xlu0 0
  %941 = vperm.xlu0 %940, %v857
  %v942 = vpop.permute.xlu0 %941
  %945 = vset.pattern.permute.xlu0 0
  %946 = vperm.xlu0 %945, %v858
  %v947 = vpop.permute.xlu0 %946
  %950 = vset.pattern.permute.xlu0 0
  %951 = vperm.xlu0 %950, %v859
  %v952 = vpop.permute.xlu0 %951
  %955 = vset.pattern.permute.xlu0 0
  %956 = vperm.xlu0 %955, %v860
  %v957 = vpop.permute.xlu0 %956
  %960 = vset.pattern.permute.xlu0 0
  %961 = vperm.xlu0 %960, %v861
  %v962 = vpop.permute.xlu0 %961
  %965 = vset.pattern.permute.xlu0 0
  %966 = vperm.xlu0 %965, %v862
  %v967 = vpop.permute.xlu0 %966
  %970 = vset.pattern.permute.xlu0 0
  %971 = vperm.xlu0 %970, %v863
  %v972 = vpop.permute.xlu0 %971
  %975 = vset.pattern.permute.xlu0 0
  %976 = vperm.xlu0 %975, %v864
  %v977 = vpop.permute.xlu0 %976
  %980 = vset.pattern.permute.xlu0 0
  %981 = vperm.xlu0 %980, %v865
  %v982 = vpop.permute.xlu0 %981
  %985 = vset.pattern.permute.xlu0 0
  %986 = vperm.xlu0 %985, %v866
  %v987 = vpop.permute.xlu0 %986
  %990 = vset.pattern.permute.xlu0 0
  %991 = vperm.xlu0 %990, %v867
  %v992 = vpop.permute.xlu0 %991
  %995 = vset.pattern.permute.xlu0 0
  %996 = vperm.xlu0 %995, %v868
  %v997 = vpop.permute.xlu0 %996
  %1000 = vset.pattern.permute.xlu0 0
  %1001 = vperm.xlu0 %1000, %v869
  %v1002 = vpop.permute.xlu0 %1001
  %1005 = vset.pattern.permute.xlu0 0
  %1006 = vperm.xlu0 %1005, %v870
  %v1007 = vpop.permute.xlu0 %1006
  %1010 = vset.pattern.permute.xlu0 0
  %1011 = vperm.xlu0 %1010, %v871
  %v1012 = vpop.permute.xlu0 %1011
  %1015 = vset.pattern.permute.xlu0 0
  %1016 = vperm.xlu0 %1015, %v872
  %v1017 = vpop.permute.xlu0 %1016
  %1020 = vset.pattern.permute.xlu0 0
  %1021 = vperm.xlu0 %1020, %v873
  %v1022 = vpop.permute.xlu0 %1021
  %v1024 = vmul.f32 %v814, %v877
  %v1025 = vmul.f32 %v815, %v882
  %v1026 = vmul.f32 %v816, %v887
  %v1027 = vmul.f32 %v817, %v892
  %v1028 = vmul.f32 %v818, %v897
  %v1029 = vmul.f32 %v819, %v902
  %v1030 = vmul.f32 %v820, %v907
  %v1031 = vmul.f32 %v821, %v912
  %v1032 = vmul.f32 %v822, %v917
  %v1033 = vmul.f32 %v823, %v922
  %v1034 = vmul.f32 %v824, %v927
  %v1035 = vmul.f32 %v825, %v932
  %v1036 = vmul.f32 %v826, %v937
  %v1037 = vmul.f32 %v827, %v942
  %v1038 = vmul.f32 %v828, %v947
  %v1039 = vmul.f32 %v829, %v952
  %v1040 = vmul.f32 %v830, %v957
  %v1041 = vmul.f32 %v831, %v962
  %v1042 = vmul.f32 %v832, %v967
  %v1043 = vmul.f32 %v833, %v972
  %v1044 = vmul.f32 %v834, %v977
  %v1045 = vmul.f32 %v835, %v982
  %v1046 = vmul.f32 %v836, %v987
  %v1047 = vmul.f32 %v837, %v992
  %v1048 = vmul.f32 %v838, %v997
  %v1049 = vmul.f32 %v839, %v1002
  %v1050 = vmul.f32 %v840, %v1007
  %v1051 = vmul.f32 %v841, %v1012
  %v1052 = vmul.f32 %v842, %v1017
  %v1053 = vmul.f32 %v843, %v1022
  %v1054 = vld [vmem:[#allocation3] sm:$0x1]
  %v1055 = vadd.f32 %v1024, %v1025
  %v1056 = vadd.f32 %v1055, %v1026
  %v1057 = vadd.f32 %v1056, %v1027
  %v1058 = vadd.f32 %v1057, %v1028
  %v1059 = vrot.slane %v1058, 4
  %v1060 = vadd.f32 %v1058, %v1059
  %v1061 = vrot.slane %v1060, 2
  %v1062 = vadd.f32 %v1060, %v1061
  %v1063 = vrot.slane %v1062, 1
  %v1064 = vadd.f32 %v1062, %v1063
  %1066 = vset.pattern.permute.xlu0 0
  %1067 = vperm.xlu0 %1066, %v1054
  %v1068 = vpop.permute.xlu0 %1067
  %v1070 = vlaneseq
  %v1071 = vshrl.u32 %v1070, 7
  %v1072 = vsub.s32 0, %v1071
  %v1073 = vrot.slane %v1068, %v1072
  %v1074 = vadd.f32 %v1064, %v1073
  %1075 = vst [vmem:[%s7] sm:$0x1] %v1074
  %v1076 = vadd.f32 %v1029, %v1030
  %v1077 = vadd.f32 %v1076, %v1031
  %v1078 = vadd.f32 %v1077, %v1032
  %v1079 = vadd.f32 %v1078, %v1033
  %v1080 = vrot.slane %v1079, 4
  %v1081 = vadd.f32 %v1079, %v1080
  %v1082 = vrot.slane %v1081, 2
  %v1083 = vadd.f32 %v1081, %v1082
  %v1084 = vrot.slane %v1083, 1
  %v1085 = vadd.f32 %v1083, %v1084
  %v1086 = vadd.f32 %v1085, %v1073
  %1087 = vst [vmem:[%s7 + $0x1] sm:$0x1] %v1086
  %v1088 = vadd.f32 %v1034, %v1035
  %v1089 = vadd.f32 %v1088, %v1036
  %v1090 = vadd.f32 %v1089, %v1037
  %v1091 = vadd.f32 %v1090, %v1038
  %v1092 = vrot.slane %v1091, 4
  %v1093 = vadd.f32 %v1091, %v1092
  %v1094 = vrot.slane %v1093, 2
  %v1095 = vadd.f32 %v1093, %v1094
  %v1096 = vrot.slane %v1095, 1
  %v1097 = vadd.f32 %v1095, %v1096
  %v1098 = vadd.f32 %v1097, %v1073
  %1099 = vst [vmem:[%s7 + $0x2] sm:$0x1] %v1098
  %v1100 = vadd.f32 %v1039, %v1040
  %v1101 = vadd.f32 %v1100, %v1041
  %v1102 = vadd.f32 %v1101, %v1042
  %v1103 = vadd.f32 %v1102, %v1043
  %v1104 = vrot.slane %v1103, 4
  %v1105 = vadd.f32 %v1103, %v1104
  %v1106 = vrot.slane %v1105, 2
  %v1107 = vadd.f32 %v1105, %v1106
  %v1108 = vrot.slane %v1107, 1
  %v1109 = vadd.f32 %v1107, %v1108
  %v1110 = vadd.f32 %v1109, %v1073
  %1111 = vst [vmem:[%s7 + $0x3] sm:$0x1] %v1110
  %v1112 = vadd.f32 %v1044, %v1045
  %v1113 = vadd.f32 %v1112, %v1046
  %v1114 = vadd.f32 %v1113, %v1047
  %v1115 = vadd.f32 %v1114, %v1048
  %v1116 = vrot.slane %v1115, 4
  %v1117 = vadd.f32 %v1115, %v1116
  %v1118 = vrot.slane %v1117, 2
  %v1119 = vadd.f32 %v1117, %v1118
  %v1120 = vrot.slane %v1119, 1
  %v1121 = vadd.f32 %v1119, %v1120
  %v1122 = vadd.f32 %v1121, %v1073
  %1123 = vst [vmem:[%s7 + $0x4] sm:$0x1] %v1122
  %v1124 = vadd.f32 %v1049, %v1050
  %v1125 = vadd.f32 %v1124, %v1051
  %v1126 = vadd.f32 %v1125, %v1052
  %v1127 = vadd.f32 %v1126, %v1053
  %v1128 = vrot.slane %v1127, 4
  %v1129 = vadd.f32 %v1127, %v1128
  %v1130 = vrot.slane %v1129, 2
  %v1131 = vadd.f32 %v1129, %v1130
  %v1132 = vrot.slane %v1131, 1
  %v1133 = vadd.f32 %v1131, %v1132
  %v1134 = vadd.f32 %v1133, %v1073
  %1135 = vst [vmem:[%s7 + $0x5] sm:$0x1] %v1134
  // Predicated region
  $region30: #{tpu_custom_call.1} parent=0 // pred_check
    _
  $region31: #{tpu_custom_call.1} parent=0 // pred_check_branch
    %1137 = sbr.rel (0) target = $region33
  $region32: #{tpu_custom_call.1} parent=0 // pred_region
    _
  $region33: #{tpu_custom_call.1} parent=0 // pred_fallthru
    _
  // Predicated region
  $region34: #{tpu_custom_call.1} parent=0 // pred_check
    _
  $region35: #{tpu_custom_call.1} parent=0 // pred_check_branch
    %1139 = sbr.rel (0) target = $region37
  $region36: #{tpu_custom_call.1} parent=0 // pred_region
    _
  $region37: #{tpu_custom_call.1} parent=0 // pred_fallthru
    _

</llo_original>
